<compile_context>
chip_gen: v5e
topology: v5e:2x2
jax: 0.10.0
libtpu: 0.0.40
codegen_flags: <defaults>
</compile_context>

<pallas_src>
import functools

import jax
import jax.numpy as jnp
from jax.experimental import pallas as pl
from jax.experimental.pallas import tpu as pltpu


def _round_up(x, m):
    return (x + m - 1) // m * m


def _vmem_capacity_bytes():
    # Generation-aware sizing; conservative 64 MiB (v7x) fallback if the query
    # is unavailable.
    try:
        info = pltpu.get_tpu_info()
        cap = getattr(info, "vmem_capacity_bytes", None)
        if cap:
            return int(cap)
    except Exception:
        pass
    return 64 * 1024 * 1024


def _pick_lane_tile(length, c_in_p, c_out_p, vmem_cap):
    """Largest 128-multiple lane tile whose double-buffered halo-in + out
    footprint stays well inside VMEM (capped at 8192, never wider than L)."""
    l128 = _round_up(length, 128)
    budget = int(vmem_cap * 0.4)                  # headroom: weights, sems, spill
    per_lane = 4 * 2 * (c_in_p + c_out_p)         # f32, double-buffered in + out
    lt = (budget // per_lane) // 128 * 128
    lt = max(128, min(8192, lt))
    return min(lt, l128)


def _conv_stats_kernel(w_ref, x_ref, stats_ref, acc_ref, *,
                       relu, length, lane_tile, k_taps):
    # w_ref:     (K, C_out_p, C_in_p)          resident conv weight taps
    # x_ref:     (C_in_p, lane_tile + halo)    halo'd input tile (lane axis = L)
    # stats_ref: (C_out_p, 2)                  per-sample [sum, sumsq] (resident)
    # acc_ref:   (C_out_p, 2)                  VMEM accumulator scratch
    j = pl.program_id(1)

    @pl.when(j == 0)
    def _init():
        acc_ref[...] = jnp.zeros_like(acc_ref)

    # Conv as K shifted MXU matmuls accumulated in f32 (no im2col slab).
    y = jnp.dot(w_ref[0], x_ref[:, 0:lane_tile],
                preferred_element_type=jnp.float32)
    for kk in range(1, k_taps):
        y += jnp.dot(w_ref[kk], x_ref[:, kk:kk + lane_tile],
                     preferred_element_type=jnp.float32)
    if relu:
        y = jnp.maximum(y, 0.0)

    # Mask lanes past the true sequence length: their halo windows see real
    # boundary data, so they must not leak into the batch statistics.
    lane = jax.lax.broadcasted_iota(jnp.int32, y.shape, 1)
    valid = lane < (length - j * lane_tile)
    yv = jnp.where(valid, y, 0.0)
    s = jnp.sum(yv, axis=1, keepdims=True)
    ss = jnp.sum(yv * yv, axis=1, keepdims=True)
    acc_ref[...] += jnp.concatenate([s, ss], axis=1)

    @pl.when(j == pl.num_programs(1) - 1)
    def _flush():
        stats_ref[...] = acc_ref[...]


def _conv_bn_kernel(w_ref, x_ref, a_ref, b_ref, o_ref, *,
                    relu, lane_tile, k_taps):
    # Recompute conv(+ReLU) and apply the per-channel affine; output blocks
    # land lane-dense, already in the final (N, C_out, L) layout.
    y = jnp.dot(w_ref[0], x_ref[:, 0:lane_tile],
                preferred_element_type=jnp.float32)
    for kk in range(1, k_taps):
        y += jnp.dot(w_ref[kk], x_ref[:, kk:kk + lane_tile],
                     preferred_element_type=jnp.float32)
    if relu:
        y = jnp.maximum(y, 0.0)
    o_ref[...] = (y * a_ref[...] + b_ref[...]).astype(o_ref.dtype)


@functools.partial(jax.jit, static_argnames=("relu", "eps"))
def batch_norm_conv(x, weight, gamma, beta, *, relu=True, eps=1e-5):
    """x: (N, C_in, L). weight: (C_out, C_in, K). gamma/beta: (C_out,)."""
    n, c_in, length = x.shape
    c_out, c_in_w, k = weight.shape
    assert c_in == c_in_w
    assert k % 2 == 1, "same-length output assumes odd kernel size"
    pad = k // 2
    f32 = jnp.float32

    c_in_p = _round_up(c_in, 8)
    c_out_p = _round_up(c_out, 8)

    vmem_cap = _vmem_capacity_bytes()
    lt = _pick_lane_tile(length, c_in_p, c_out_p, vmem_cap)
    num_l_tiles = int(pl.cdiv(length, lt))
    halo = _round_up(2 * pad, 128) if pad > 0 else 0   # keep block 128-aligned
    halo_w = lt + halo
    l_total = (num_l_tiles - 1) * lt + halo_w

    # ---- glue: per-sample zero pad + per-tile halo windows (~1x input R+W,
    #      replaces the old K-times im2col slab + pad/stack/transpose passes) --
    x_pad = jnp.pad(x, ((0, 0), (0, c_in_p - c_in),
                        (pad, l_total - pad - length)))
    x_halo = jnp.stack(
        [x_pad[:, :, j * lt: j * lt + halo_w] for j in range(num_l_tiles)],
        axis=1)                                        # (N, J, C_in_p, halo_w)

    # Conv weight as K taps of (C_out_p, C_in_p) matrices (module has bias=False).
    w_taps = jnp.pad(weight.astype(x.dtype).transpose(2, 0, 1),
                     ((0, 0), (0, c_out_p - c_out), (0, c_in_p - c_in)))

    vmem_limit = int(min(vmem_cap * 3 // 4, 96 * 1024 * 1024))
    flops = 2 * k * c_in_p * c_out_p * n * num_l_tiles * lt
    item = x.dtype.itemsize

    # Weight block is tiny here; double-buffering it is negligible.  (For very
    # large C_out*C_in*K, single-buffering the resident weight would free VMEM.)
    w_spec = pl.BlockSpec((k, c_out_p, c_in_p), lambda i, j: (0, 0, 0))
    x_spec = pl.BlockSpec((None, None, c_in_p, halo_w),
                          lambda i, j: (i, j, 0, 0))

    # ---- sweep 1: conv + ReLU + per-sample per-channel sum / sumsq ----------
    stats = pl.pallas_call(
        functools.partial(_conv_stats_kernel, relu=relu, length=length,
                          lane_tile=lt, k_taps=k),
        grid=(n, num_l_tiles),
        in_specs=[w_spec, x_spec],
        out_specs=pl.BlockSpec((None, c_out_p, 2), lambda i, j: (i, 0, 0)),
        out_shape=jax.ShapeDtypeStruct((n, c_out_p, 2), f32),
        scratch_shapes=[pltpu.VMEM((c_out_p, 2), f32)],
        compiler_params=pltpu.CompilerParams(
            dimension_semantics=("parallel", "arbitrary"),
            vmem_limit_bytes=vmem_limit),
        cost_estimate=pl.CostEstimate(
            flops=flops, transcendentals=0,
            bytes_accessed=int(x_halo.size * item + w_taps.size * item
                               + n * c_out_p * 2 * 4)),
    )(w_taps, x_halo)

    # ---- glue: finalize training-mode batch stats -> per-channel affine -----
    totals = jnp.sum(stats, axis=0)                 # (C_out_p, 2)
    count = float(n * length)                       # masked lanes contribute 0
    mean = totals[:, 0] / count
    # TODO(synk): one-pass E[y^2]-E[y]^2 can cancel for very large N*L; a
    # Welford-style per-tile combine would be safer if that regime matters.
    var = jnp.maximum(totals[:, 1] / count - mean * mean, 0.0)
    inv_std = jax.lax.rsqrt(var + eps)
    gamma_p = jnp.pad(gamma.astype(f32), (0, c_out_p - c_out))
    beta_p = jnp.pad(beta.astype(f32), (0, c_out_p - c_out))
    a = (gamma_p * inv_std).reshape(c_out_p, 1)
    b = (beta_p - mean * gamma_p * inv_std).reshape(c_out_p, 1)

    # ---- sweep 2: recompute conv + ReLU, apply affine, write final layout ---
    y_full = pl.pallas_call(
        functools.partial(_conv_bn_kernel, relu=relu, lane_tile=lt, k_taps=k),
        grid=(n, num_l_tiles),
        in_specs=[
            w_spec,
            x_spec,
            pl.BlockSpec((c_out_p, 1), lambda i, j: (0, 0)),
            pl.BlockSpec((c_out_p, 1), lambda i, j: (0, 0)),
        ],
        out_specs=pl.BlockSpec((None, c_out_p, lt), lambda i, j: (i, 0, j)),
        out_shape=jax.ShapeDtypeStruct((n, c_out_p, num_l_tiles * lt), x.dtype),
        compiler_params=pltpu.CompilerParams(
            dimension_semantics=("parallel", "parallel"),
            vmem_limit_bytes=vmem_limit),
        cost_estimate=pl.CostEstimate(
            flops=flops, transcendentals=0,
            bytes_accessed=int(x_halo.size * item + w_taps.size * item
                               + 2 * c_out_p * 4
                               + n * c_out_p * num_l_tiles * lt * item)),
    )(w_taps, x_halo, a, b)

    # Output is already (N, C_out_p, L_padded); just slice — no transpose pass.
    return y_full[:, :c_out, :length]


def _reference(x, weight, gamma, beta, *, relu=True, eps=1e-5):
    # Pure-JAX reference matching PyTorch BatchNormConv.forward (training mode).
    k = weight.shape[-1]
    y = jax.lax.conv_general_dilated(
        x, weight, window_strides=(1,), padding=[(k // 2, k // 2)],
        dimension_numbers=('NCH', 'OIH', 'NCH'))
    if relu:
        y = jnp.maximum(y, 0.0)
    mean = jnp.mean(y, axis=(0, 2), keepdims=True)
    var = jnp.mean((y - mean) ** 2, axis=(0, 2), keepdims=True)
    return (y - mean) * jax.lax.rsqrt(var + eps) * gamma.reshape(1, -1, 1) \
        + beta.reshape(1, -1, 1)


if __name__ == "__main__":
    # Small deterministic example consistent with the module:
    # input_channels=4, output_channels=8, kernel_size=3, batch=2, seq_len=16.
    N, C_IN, C_OUT, K, L = 2, 4, 8, 3, 16

    key = jax.random.PRNGKey(0)
    kx, kw = jax.random.split(key)
    x = jax.random.normal(kx, (N, C_IN, L), dtype=jnp.float32)
    bound = 1.0 / (C_IN * K) ** 0.5
    weight = jax.random.uniform(kw, (C_OUT, C_IN, K), jnp.float32, -bound, bound)
    gamma = jnp.ones((C_OUT,), jnp.float32)     # BatchNorm1d default weight
    beta = jnp.zeros((C_OUT,), jnp.float32)     # BatchNorm1d default bias

    out = jax.block_until_ready(batch_norm_conv(x, weight, gamma, beta, relu=True))

    ref = jax.block_until_ready(_reference(x, weight, gamma, beta, relu=True))
    assert out.shape == (N, C_OUT, L)
    assert jnp.allclose(out, ref, atol=1e-4, rtol=1e-4), "mismatch vs reference"

    print("KERNEL_OK")
</pallas_src>

<mosaic_0001>
module attributes {stable_mosaic.version = 11 : i64} {
  func.func @_conv_stats_kernel(%arg0: i32, %arg1: i32, %arg2: memref<3x8x8xf32, #tpu.memory_space<vmem>>, %arg3: memref<1x1x8x256xf32, #tpu.memory_space<vmem>>, %arg4: memref<1x8x2xf32, #tpu.memory_space<vmem>>, %arg5: memref<8x2xf32, #tpu.memory_space<vmem>>) attributes {dimension_semantics = [#tpu.dimension_semantics<parallel>, #tpu.dimension_semantics<arbitrary>], iteration_bounds = array<i64: 2, 1>, scalar_prefetch = 0 : i64, scratch_operands = 1 : i64, tpu.core_type = #tpu.core_type<tc>, window_params = [{pipeline_mode = #tpu.pipeline_mode<synchronous>, transform_indices = @transform_0, window_bounds = array<i64: 3, 8, 8>}, {transform_indices = @transform_1, window_bounds = array<i64: 1, 1, 8, 256>}, {transform_indices = @transform_2, window_bounds = array<i64: 1, 8, 2>}]} {
    %c0_i32 = arith.constant 0 : i32
    %0 = arith.cmpi eq, %arg1, %c0_i32 : i32
    %1 = arith.extui %0 : i1 to i32
    %c0_i32_0 = arith.constant 0 : i32
    %2 = arith.cmpi ne, %1, %c0_i32_0 : i32
    scf.if %2 {
      %cst_31 = arith.constant 0.000000e+00 : f32
      %41 = vector.broadcast %cst_31 : f32 to vector<8x2xf32>
      %c0_32 = arith.constant 0 : index
      %c0_33 = arith.constant 0 : index
      %42 = vector.load %arg5[%c0_32, %c0_33] : memref<8x2xf32, #tpu.memory_space<vmem>>, vector<8x2xf32>
      tpu.vector_store %arg5[%c0_32, %c0_33], %41 {strides = array<i32>} : memref<8x2xf32, #tpu.memory_space<vmem>>, vector<8x2xf32>,
    } else {
    }
    %c0 = arith.constant 0 : index
    %c0_1 = arith.constant 0 : index
    %c0_2 = arith.constant 0 : index
    %3 = vector.load %arg2[%c0, %c0_1, %c0_2] : memref<3x8x8xf32, #tpu.memory_space<vmem>>, vector<1x8x8xf32>
    %4 = vector.shape_cast %3 : vector<1x8x8xf32> to vector<8x8xf32>
    %c0_3 = arith.constant 0 : index
    %c0_4 = arith.constant 0 : index
    %c0_5 = arith.constant 0 : index
    %c0_6 = arith.constant 0 : index
    %5 = vector.load %arg3[%c0_3, %c0_4, %c0_5, %c0_6] : memref<1x1x8x256xf32, #tpu.memory_space<vmem>>, vector<1x1x8x128xf32>
    %6 = vector.shape_cast %5 : vector<1x1x8x128xf32> to vector<8x128xf32>
    %cst = arith.constant dense<0.000000e+00> : vector<8x128xf32>
    %7 = tpu.matmul %4, %6, %cst {dimension_numbers = #tpu.dot_dimension_numbers<[1], [0], [0], [1], [0, 0, 1, 1], [], []>} : vector<8x8xf32>, vector<8x128xf32>, vector<8x128xf32> -> vector<8x128xf32>
    %c1 = arith.constant 1 : index
    %c0_7 = arith.constant 0 : index
    %c0_8 = arith.constant 0 : index
    %8 = vector.load %arg2[%c1, %c0_7, %c0_8] : memref<3x8x8xf32, #tpu.memory_space<vmem>>, vector<1x8x8xf32>
    %9 = vector.shape_cast %8 : vector<1x8x8xf32> to vector<8x8xf32>
    %c0_9 = arith.constant 0 : index
    %c0_10 = arith.constant 0 : index
    %c0_11 = arith.constant 0 : index
    %c1_12 = arith.constant 1 : index
    %10 = vector.load %arg3[%c0_9, %c0_10, %c0_11, %c1_12] : memref<1x1x8x256xf32, #tpu.memory_space<vmem>>, vector<1x1x8x128xf32>
    %11 = vector.shape_cast %10 : vector<1x1x8x128xf32> to vector<8x128xf32>
    %cst_13 = arith.constant dense<0.000000e+00> : vector<8x128xf32>
    %12 = tpu.matmul %9, %11, %cst_13 {dimension_numbers = #tpu.dot_dimension_numbers<[1], [0], [0], [1], [0, 0, 1, 1], [], []>} : vector<8x8xf32>, vector<8x128xf32>, vector<8x128xf32> -> vector<8x128xf32>
    %13 = arith.addf %7, %12 : vector<8x128xf32>
    %c2 = arith.constant 2 : index
    %c0_14 = arith.constant 0 : index
    %c0_15 = arith.constant 0 : index
    %14 = vector.load %arg2[%c2, %c0_14, %c0_15] : memref<3x8x8xf32, #tpu.memory_space<vmem>>, vector<1x8x8xf32>
    %15 = vector.shape_cast %14 : vector<1x8x8xf32> to vector<8x8xf32>
    %c0_16 = arith.constant 0 : index
    %c0_17 = arith.constant 0 : index
    %c0_18 = arith.constant 0 : index
    %c2_19 = arith.constant 2 : index
    %16 = vector.load %arg3[%c0_16, %c0_17, %c0_18, %c2_19] : memref<1x1x8x256xf32, #tpu.memory_space<vmem>>, vector<1x1x8x128xf32>
    %17 = vector.shape_cast %16 : vector<1x1x8x128xf32> to vector<8x128xf32>
    %cst_20 = arith.constant dense<0.000000e+00> : vector<8x128xf32>
    %18 = tpu.matmul %15, %17, %cst_20 {dimension_numbers = #tpu.dot_dimension_numbers<[1], [0], [0], [1], [0, 0, 1, 1], [], []>} : vector<8x8xf32>, vector<8x128xf32>, vector<8x128xf32> -> vector<8x128xf32>
    %19 = arith.addf %13, %18 : vector<8x128xf32>
    %cst_21 = arith.constant 0.000000e+00 : f32
    %20 = vector.broadcast %cst_21 : f32 to vector<8x128xf32>
    %21 = arith.maximumf %19, %20 : vector<8x128xf32>
    %22 = tpu.iota {dimensions = array<i32: 1>} : vector<8x128xi32>
    %c128_i32 = arith.constant 128 : i32
    %23 = arith.muli %arg1, %c128_i32 : i32
    %c16_i32 = arith.constant 16 : i32
    %24 = arith.subi %c16_i32, %23 : i32
    %25 = vector.broadcast %24 : i32 to vector<8x128xi32>
    %26 = arith.cmpi slt, %22, %25 : vector<8x128xi32>
    %cst_22 = arith.constant 0.000000e+00 : f32
    %27 = vector.broadcast %cst_22 : f32 to vector<8x128xf32>
    %28 = arith.select %26, %21, %27 : vector<8x128xi1>, vector<8x128xf32>
    %cst_23 = arith.constant dense<0.000000e+00> : vector<8xf32>
    %29 = vector.multi_reduction <add>, %28, %cst_23 [1] : vector<8x128xf32> to vector<8xf32>
    %30 = vector.shape_cast %29 : vector<8xf32> to vector<8x1xf32>
    %31 = arith.mulf %28, %28 : vector<8x128xf32>
    %cst_24 = arith.constant dense<0.000000e+00> : vector<8xf32>
    %32 = vector.multi_reduction <add>, %31, %cst_24 [1] : vector<8x128xf32> to vector<8xf32>
    %33 = vector.shape_cast %32 : vector<8xf32> to vector<8x1xf32>
    %c0_25 = arith.constant 0 : index
    %c0_26 = arith.constant 0 : index
    %34 = vector.load %arg5[%c0_25, %c0_26] : memref<8x2xf32, #tpu.memory_space<vmem>>, vector<8x2xf32>
    %35 = tpu.concatenate %30, %33 in 1 : vector<8x1xf32>, vector<8x1xf32> -> vector<8x2xf32>
    %36 = arith.addf %34, %35 : vector<8x2xf32>
    %c0_27 = arith.constant 0 : index
    %c0_28 = arith.constant 0 : index
    %37 = vector.load %arg5[%c0_27, %c0_28] : memref<8x2xf32, #tpu.memory_space<vmem>>, vector<8x2xf32>
    tpu.vector_store %arg5[%c0_27, %c0_28], %36 {strides = array<i32>} : memref<8x2xf32, #tpu.memory_space<vmem>>, vector<8x2xf32>,
    %c0_i32_29 = arith.constant 0 : i32
    %38 = arith.cmpi eq, %arg1, %c0_i32_29 : i32
    %39 = arith.extui %38 : i1 to i32
    %c0_i32_30 = arith.constant 0 : i32
    %40 = arith.cmpi ne, %39, %c0_i32_30 : i32
    scf.if %40 {
      %c0_31 = arith.constant 0 : index
      %c0_32 = arith.constant 0 : index
      %41 = vector.load %arg5[%c0_31, %c0_32] : memref<8x2xf32, #tpu.memory_space<vmem>>, vector<8x2xf32>
      %c0_33 = arith.constant 0 : index
      %c0_34 = arith.constant 0 : index
      %c0_35 = arith.constant 0 : index
      %42 = vector.load %arg4[%c0_33, %c0_34, %c0_35] : memref<1x8x2xf32, #tpu.memory_space<vmem>>, vector<1x8x2xf32>
      %43 = vector.shape_cast %42 : vector<1x8x2xf32> to vector<8x2xf32>
      %44 = vector.shape_cast %41 : vector<8x2xf32> to vector<1x8x2xf32>
      tpu.vector_store %arg4[%c0_33, %c0_34, %c0_35], %44 {strides = array<i32>} : memref<1x8x2xf32, #tpu.memory_space<vmem>>, vector<1x8x2xf32>,
    } else {
    }
    return
  }
  func.func @transform_0(%arg0: i32, %arg1: i32) -> (i32, i32, i32) {
    %c0_i32 = arith.constant 0 : i32
    %c0_i32_0 = arith.constant 0 : i32
    %c0_i32_1 = arith.constant 0 : i32
    %c0_i32_2 = arith.constant 0 : i32
    return %c0_i32, %c0_i32_0, %c0_i32_1 : i32, i32, i32
  }
  func.func @transform_1(%arg0: i32, %arg1: i32) -> (i32, i32, i32, i32) {
    %c0_i32 = arith.constant 0 : i32
    %c0_i32_0 = arith.constant 0 : i32
    %c0_i32_1 = arith.constant 0 : i32
    return %arg0, %arg1, %c0_i32, %c0_i32_0 : i32, i32, i32, i32
  }
  func.func @transform_2(%arg0: i32, %arg1: i32) -> (i32, i32, i32) {
    %c0_i32 = arith.constant 0 : i32
    %c0_i32_0 = arith.constant 0 : i32
    %c0_i32_1 = arith.constant 0 : i32
    return %arg0, %c0_i32, %c0_i32_0 : i32, i32, i32
  }
}

module attributes {stable_mosaic.version = 11 : i64} {
  func.func @_conv_bn_kernel(%arg0: i32, %arg1: i32, %arg2: memref<3x8x8xf32, #tpu.memory_space<vmem>>, %arg3: memref<1x1x8x256xf32, #tpu.memory_space<vmem>>, %arg4: memref<8x1xf32, #tpu.memory_space<vmem>>, %arg5: memref<8x1xf32, #tpu.memory_space<vmem>>, %arg6: memref<1x8x128xf32, #tpu.memory_space<vmem>>) attributes {dimension_semantics = [#tpu.dimension_semantics<parallel>, #tpu.dimension_semantics<parallel>], iteration_bounds = array<i64: 2, 1>, scalar_prefetch = 0 : i64, scratch_operands = 0 : i64, tpu.core_type = #tpu.core_type<tc>, window_params = [{pipeline_mode = #tpu.pipeline_mode<synchronous>, transform_indices = @transform_0, window_bounds = array<i64: 3, 8, 8>}, {transform_indices = @transform_1, window_bounds = array<i64: 1, 1, 8, 256>}, {pipeline_mode = #tpu.pipeline_mode<synchronous>, transform_indices = @transform_2, window_bounds = array<i64: 8, 1>}, {pipeline_mode = #tpu.pipeline_mode<synchronous>, transform_indices = @transform_3, window_bounds = array<i64: 8, 1>}, {transform_indices = @transform_4, window_bounds = array<i64: 1, 8, 128>}]} {
    %c0 = arith.constant 0 : index
    %c0_0 = arith.constant 0 : index
    %c0_1 = arith.constant 0 : index
    %0 = vector.load %arg2[%c0, %c0_0, %c0_1] : memref<3x8x8xf32, #tpu.memory_space<vmem>>, vector<1x8x8xf32>
    %1 = vector.shape_cast %0 : vector<1x8x8xf32> to vector<8x8xf32>
    %c0_2 = arith.constant 0 : index
    %c0_3 = arith.constant 0 : index
    %c0_4 = arith.constant 0 : index
    %c0_5 = arith.constant 0 : index
    %2 = vector.load %arg3[%c0_2, %c0_3, %c0_4, %c0_5] : memref<1x1x8x256xf32, #tpu.memory_space<vmem>>, vector<1x1x8x128xf32>
    %3 = vector.shape_cast %2 : vector<1x1x8x128xf32> to vector<8x128xf32>
    %cst = arith.constant dense<0.000000e+00> : vector<8x128xf32>
    %4 = tpu.matmul %1, %3, %cst {dimension_numbers = #tpu.dot_dimension_numbers<[1], [0], [0], [1], [0, 0, 1, 1], [], []>} : vector<8x8xf32>, vector<8x128xf32>, vector<8x128xf32> -> vector<8x128xf32>
    %c1 = arith.constant 1 : index
    %c0_6 = arith.constant 0 : index
    %c0_7 = arith.constant 0 : index
    %5 = vector.load %arg2[%c1, %c0_6, %c0_7] : memref<3x8x8xf32, #tpu.memory_space<vmem>>, vector<1x8x8xf32>
    %6 = vector.shape_cast %5 : vector<1x8x8xf32> to vector<8x8xf32>
    %c0_8 = arith.constant 0 : index
    %c0_9 = arith.constant 0 : index
    %c0_10 = arith.constant 0 : index
    %c1_11 = arith.constant 1 : index
    %7 = vector.load %arg3[%c0_8, %c0_9, %c0_10, %c1_11] : memref<1x1x8x256xf32, #tpu.memory_space<vmem>>, vector<1x1x8x128xf32>
    %8 = vector.shape_cast %7 : vector<1x1x8x128xf32> to vector<8x128xf32>
    %cst_12 = arith.constant dense<0.000000e+00> : vector<8x128xf32>
    %9 = tpu.matmul %6, %8, %cst_12 {dimension_numbers = #tpu.dot_dimension_numbers<[1], [0], [0], [1], [0, 0, 1, 1], [], []>} : vector<8x8xf32>, vector<8x128xf32>, vector<8x128xf32> -> vector<8x128xf32>
    %10 = arith.addf %4, %9 : vector<8x128xf32>
    %c2 = arith.constant 2 : index
    %c0_13 = arith.constant 0 : index
    %c0_14 = arith.constant 0 : index
    %11 = vector.load %arg2[%c2, %c0_13, %c0_14] : memref<3x8x8xf32, #tpu.memory_space<vmem>>, vector<1x8x8xf32>
    %12 = vector.shape_cast %11 : vector<1x8x8xf32> to vector<8x8xf32>
    %c0_15 = arith.constant 0 : index
    %c0_16 = arith.constant 0 : index
    %c0_17 = arith.constant 0 : index
    %c2_18 = arith.constant 2 : index
    %13 = vector.load %arg3[%c0_15, %c0_16, %c0_17, %c2_18] : memref<1x1x8x256xf32, #tpu.memory_space<vmem>>, vector<1x1x8x128xf32>
    %14 = vector.shape_cast %13 : vector<1x1x8x128xf32> to vector<8x128xf32>
    %cst_19 = arith.constant dense<0.000000e+00> : vector<8x128xf32>
    %15 = tpu.matmul %12, %14, %cst_19 {dimension_numbers = #tpu.dot_dimension_numbers<[1], [0], [0], [1], [0, 0, 1, 1], [], []>} : vector<8x8xf32>, vector<8x128xf32>, vector<8x128xf32> -> vector<8x128xf32>
    %16 = arith.addf %10, %15 : vector<8x128xf32>
    %cst_20 = arith.constant 0.000000e+00 : f32
    %17 = vector.broadcast %cst_20 : f32 to vector<8x128xf32>
    %18 = arith.maximumf %16, %17 : vector<8x128xf32>
    %c0_21 = arith.constant 0 : index
    %c0_22 = arith.constant 0 : index
    %19 = vector.load %arg4[%c0_21, %c0_22] : memref<8x1xf32, #tpu.memory_space<vmem>>, vector<8x1xf32>
    %20 = vector.broadcast %19 : vector<8x1xf32> to vector<8x128xf32>
    %21 = arith.mulf %18, %20 : vector<8x128xf32>
    %c0_23 = arith.constant 0 : index
    %c0_24 = arith.constant 0 : index
    %22 = vector.load %arg5[%c0_23, %c0_24] : memref<8x1xf32, #tpu.memory_space<vmem>>, vector<8x1xf32>
    %23 = vector.broadcast %22 : vector<8x1xf32> to vector<8x128xf32>
    %24 = arith.addf %21, %23 : vector<8x128xf32>
    %c0_25 = arith.constant 0 : index
    %c0_26 = arith.constant 0 : index
    %c0_27 = arith.constant 0 : index
    %25 = vector.load %arg6[%c0_25, %c0_26, %c0_27] : memref<1x8x128xf32, #tpu.memory_space<vmem>>, vector<1x8x128xf32>
    %26 = vector.shape_cast %25 : vector<1x8x128xf32> to vector<8x128xf32>
    %27 = vector.shape_cast %24 : vector<8x128xf32> to vector<1x8x128xf32>
    tpu.vector_store %arg6[%c0_25, %c0_26, %c0_27], %27 {strides = array<i32>} : memref<1x8x128xf32, #tpu.memory_space<vmem>>, vector<1x8x128xf32>,
    return
  }
  func.func @transform_0(%arg0: i32, %arg1: i32) -> (i32, i32, i32) {
    %c0_i32 = arith.constant 0 : i32
    %c0_i32_0 = arith.constant 0 : i32
    %c0_i32_1 = arith.constant 0 : i32
    %c0_i32_2 = arith.constant 0 : i32
    return %c0_i32, %c0_i32_0, %c0_i32_1 : i32, i32, i32
  }
  func.func @transform_1(%arg0: i32, %arg1: i32) -> (i32, i32, i32, i32) {
    %c0_i32 = arith.constant 0 : i32
    %c0_i32_0 = arith.constant 0 : i32
    %c0_i32_1 = arith.constant 0 : i32
    return %arg0, %arg1, %c0_i32, %c0_i32_0 : i32, i32, i32, i32
  }
  func.func @transform_2(%arg0: i32, %arg1: i32) -> (i32, i32) {
    %c0_i32 = arith.constant 0 : i32
    %c0_i32_0 = arith.constant 0 : i32
    %c0_i32_1 = arith.constant 0 : i32
    return %c0_i32, %c0_i32_0 : i32, i32
  }
  func.func @transform_3(%arg0: i32, %arg1: i32) -> (i32, i32) {
    %c0_i32 = arith.constant 0 : i32
    %c0_i32_0 = arith.constant 0 : i32
    %c0_i32_1 = arith.constant 0 : i32
    return %c0_i32, %c0_i32_0 : i32, i32
  }
  func.func @transform_4(%arg0: i32, %arg1: i32) -> (i32, i32, i32) {
    %c0_i32 = arith.constant 0 : i32
    %c0_i32_0 = arith.constant 0 : i32
    return %arg0, %c0_i32, %arg1 : i32, i32, i32
  }
}

</mosaic_0001>

<llo_original>
// kernel: batch_norm_conv.2
$region0: #{batch_norm_conv.2}
  #allocation0 [shape = 'u32[]', space=smem, size = 0x4, offset = 0x4, fixed_abs, tag = 'smem constant byte address 0x4 - core index']
  #allocation1 [shape = 'u32[72,128]{1,0:T(1,128)}', space=vmem, size = 0x9000, scoped, tag = 'internal scratch']
  #allocation2 [shape = 'f32[8,2]{1,0:T(8,128)}', space=vmem, size = 0x1000, scoped, tag = 'scratch operand']
  %s0 = inlined_call_operand.vmem [shape: f32[3,8,8], index: 0, kind: input, shape index: {}]
  %s1 = inlined_call_operand.vmem [shape: f32[2,1,8,256], index: 1, kind: input, shape index: {}]
  %s2 = inlined_call_operand.vmem [shape: f32[2,8,2], index: 2, kind: output, shape index: {}]
  %s3 = sld [smem:[#allocation0]]
  $region49: #{batch_norm_conv.2} parent=0
    _
  %s5 = ssub.s32 1, %s3
  %s6 = scalar_select 0, %s5, %s3
  loop: start=0, step=1, limit=4
  $region2: #{batch_norm_conv.2} parent=0 // loop_pre_header
    _
  $region3: #{batch_norm_conv.2} parent=0 // loop_header
    %s8 = sphi 0, %s12
    %p9 = scmp.ge.s32.totalorder %s8, 4
    %s15 = sphi 0, %s27
    %s16 = sphi 0, %s23
    %s17 = sphi 0, %s15
    %s18 = sphi 0, %s16
    %s19 = sphi 0, %s17
    %s20 = sphi 0, %s18
    %s28 = sphi 0, %s28
    %s30 = sphi 0, %s28
    %s31 = sphi 0, %s30
    %s45 = sphi 0, %s31
    %s53 = sphi 0, %s55
    %s56 = sphi 0, %s53
    %s57 = sphi 0, %s56
    %s73 = sphi 0, %s57
    %s79 = sphi 0, %s81
    %s82 = sphi 0, %s79
    %s83 = sphi 0, %s82
    %s99 = sphi 0, %s83
  $region4: #{batch_norm_conv.2} parent=0 // loop_header_branch
    %11 = sbr.rel (%p9) target = $region8
  $region5: #{batch_norm_conv.2} parent=0 // loop_body
    %s13 = ssub.s32 %s8, 1
    %s14 = ssub.s32 %s8, 2
    %s21 = sadd.s32 1, %s16
    %p22 = scmp.ge.s32.totalorder %s21, 1
    %s23 = scalar_select %p22, 0, %s21
    %s24 = sadd.s32 1, %s15
    %s25 = scalar_select %p22, %s24, %s15
    %p26 = scmp.ge.s32.totalorder %s25, 2
    %s27 = scalar_select %p26, 0, %s25
    %s29 = sadd.s32 %s28, 1
    %p32 = scmp.eq.s32.totalorder %s8, 1
    %p33 = scmp.ne.s32.totalorder %s28, %s30
    %p34 = scmp.eq.s32.totalorder %s8, 0
    %p35 = por %p33, %p34
    %p36 = scmp.ne.s32.totalorder %s28, %s30
    %p37 = scmp.eq.s32.totalorder %s13, 1
    %p38 = por %p36, %p37
    %p39 = scmp.ne.s32.totalorder %s30, %s31
    %p40 = scmp.eq.s32.totalorder %s13, 0
    %p41 = por %p39, %p40
    %p42 = scmp.ne.s32.totalorder %s30, %s31
    %p43 = scmp.eq.s32.totalorder %s14, 1
    %p44 = por %p42, %p43
    %p46 = scmp.ne.s32.totalorder %s31, %s45
    %p47 = scmp.eq.s32.totalorder %s14, 0
    %p48 = por %p46, %p47
    %s49 = ssub.s32 %s15, %s27
    %s50 = ssub.s32 %s16, %s23
    %s51 = sor.u32 %s49, %s50
    %p52 = scmp.eq.s32.totalorder %s51, 0
    %s54 = sadd.s32 %s53, 1
    %s55 = scalar_select %p52, %s53, %s54
    %p58 = pneg %p52
    %p59 = scmp.eq.s32.totalorder %s8, 1
    %p60 = por %p58, %p59
    %p61 = scmp.ne.s32.totalorder %s53, %s56
    %p62 = scmp.eq.s32.totalorder %s8, 0
    %p63 = por %p61, %p62
    %p64 = scmp.ne.s32.totalorder %s53, %s56
    %p65 = scmp.eq.s32.totalorder %s13, 1
    %p66 = por %p64, %p65
    %p67 = scmp.ne.s32.totalorder %s56, %s57
    %p68 = scmp.eq.s32.totalorder %s13, 0
    %p69 = por %p67, %p68
    %p70 = scmp.ne.s32.totalorder %s56, %s57
    %p71 = scmp.eq.s32.totalorder %s14, 1
    %p72 = por %p70, %p71
    %p74 = scmp.ne.s32.totalorder %s57, %s73
    %p75 = scmp.eq.s32.totalorder %s14, 0
    %p76 = por %p74, %p75
    %s77 = ssub.s32 %s15, %s27
    %p78 = scmp.eq.s32.totalorder %s77, 0
    %s80 = sadd.s32 %s79, 1
    %s81 = scalar_select %p78, %s79, %s80
    %p84 = pneg %p78
    %p85 = scmp.eq.s32.totalorder %s8, 1
    %p86 = por %p84, %p85
    %p87 = scmp.ne.s32.totalorder %s79, %s82
    %p88 = scmp.eq.s32.totalorder %s8, 0
    %p89 = por %p87, %p88
    %p90 = scmp.ne.s32.totalorder %s79, %s82
    %p91 = scmp.eq.s32.totalorder %s13, 1
    %p92 = por %p90, %p91
    %p93 = scmp.ne.s32.totalorder %s82, %s83
    %p94 = scmp.eq.s32.totalorder %s13, 0
    %p95 = por %p93, %p94
    %p96 = scmp.ne.s32.totalorder %s82, %s83
    %p97 = scmp.eq.s32.totalorder %s14, 1
    %p98 = por %p96, %p97
    %p100 = scmp.ne.s32.totalorder %s83, %s99
    %p101 = scmp.eq.s32.totalorder %s14, 0
    %p102 = por %p100, %p101
    %p103 = scmp.le.s32.totalorder 1, %s8
    %p104 = scmp.lt.s32.totalorder %s8, 3
    %p105 = pnand %p103, %p104
    %p106 = pneg %p105
    // Predicated region
    $region9: #{batch_norm_conv.2} parent=5 // pred_check
      _
    $region10: #{batch_norm_conv.2} parent=5 // pred_check_branch
      %108 = sbr.rel (%p105) target = $region12
    $region11: #{batch_norm_conv.2} parent=5 // pred_region
      %s109 = ssub.s32 %s8, 1
      // Predicated region
      $region13: #{batch_norm_conv.2} parent=11 // pred_check
        %p110 = pneg %p41
      $region14: #{batch_norm_conv.2} parent=11 // pred_check_branch
        %112 = sbr.rel (%p110) target = $region16
      $region15: #{batch_norm_conv.2} parent=11 // pred_region
        _
      $region16: #{batch_norm_conv.2} parent=11 // pred_fallthru
        _
    $region12: #{batch_norm_conv.2} parent=5 // pred_fallthru
      _
    %p113 = scmp.lt.s32.totalorder %s8, 2
    // Predicated region
    $region17: #{batch_norm_conv.2} parent=5 // pred_check
      %p114 = pneg %p113
    $region18: #{batch_norm_conv.2} parent=5 // pred_check_branch
      %116 = sbr.rel (%p114) target = $region20
    $region19: #{batch_norm_conv.2} parent=5 // pred_region
      // Predicated region
      $region21: #{batch_norm_conv.2} parent=19 // pred_check
        %p117 = pneg %p63
      $region22: #{batch_norm_conv.2} parent=19 // pred_check_branch
        %119 = sbr.rel (%p117) target = $region24
      $region23: #{batch_norm_conv.2} parent=19 // pred_region
        %p120 = scmp.lt.s32.totalorder %s15, 1
        %s121 = scalar_select %p120, %s15, 1
        %p122 = scmp.lt.s32.totalorder %s16, 0
        %s123 = scalar_select %p122, %s16, 0
        %s124 = smul.addr %s123, 2
        %s125 = smul.addr %s121, 2
        %s126 = sadd.s32 %s124, %s125
        %s127 = smul.addr %s126, 8
        %s128 = scalar_lea.vmem %s1, %s127
      $region24: #{batch_norm_conv.2} parent=19 // pred_fallthru
        _
    $region20: #{batch_norm_conv.2} parent=5 // pred_fallthru
      _
    %p129 = scmp.le.s32.totalorder 1, %s8
    %p130 = scmp.lt.s32.totalorder %s8, 3
    %p131 = pnand %p129, %p130
    %p132 = pneg %p131
    // Predicated region
    $region25: #{batch_norm_conv.2} parent=5 // pred_check
      _
    $region26: #{batch_norm_conv.2} parent=5 // pred_check_branch
      %134 = sbr.rel (%p131) target = $region28
    $region27: #{batch_norm_conv.2} parent=5 // pred_region
      %s135 = ssub.s32 %s8, 1
      %p136 = pneg %p41
      %p137 = pneg %p38
      %p138 = scmp.lt.s32.totalorder %s17, 1
      %s139 = scalar_select %p138, %s17, 1
      %p140 = scmp.lt.s32.totalorder %s18, 0
      %s141 = scalar_select %p140, %s18, 0
      %s142 = smul.addr %s141, 2
      %s143 = smul.addr %s139, 2
      %s144 = sadd.s32 %s142, %s143
      %s145 = smul.addr %s144, 8
      %s146 = scalar_lea.vmem %s1, %s145
      %p147 = pneg %p69
      %p148 = pneg %p66
      %p149 = pneg %p95
      %p150 = pneg %p92
      %p151 = scmp.lt.s32.totalorder %s17, 1
      %s152 = scalar_select %p151, %s17, 1
      %s153 = smul.addr %s152, 8
      %s154 = scalar_lea.vmem %s2, %s153
      %p155 = scmp.lt.s32.totalorder %s17, 1
      %s156 = scalar_select %p155, %s17, 1
      %p157 = scmp.lt.s32.totalorder %s18, 0
      %s158 = scalar_select %p157, %s18, 0
      %s159 = smul.addr %s158, 2
      %s160 = smul.addr %s156, 2
      %s161 = sadd.s32 %s159, %s160
      %s162 = smul.addr %s161, 8
      %s163 = scalar_lea.vmem %s1, %s162
      %p164 = scmp.lt.s32.totalorder %s17, 1
      %s165 = scalar_select %p164, %s17, 1
      %s166 = smul.addr %s165, 8
      %s167 = scalar_lea.vmem %s2, %s166
      %p168 = scmp.eq.s32.totalorder %s18, 0
      // Predicated region
      $region29: #{batch_norm_conv.2} parent=27 // pred_check
        %p169 = pneg %p168
      $region30: #{batch_norm_conv.2} parent=27 // pred_check_branch
        %171 = sbr.rel (%p169) target = $region32
      $region31: #{batch_norm_conv.2} parent=27 // pred_region
        %vm172 = vcmask 15360
        %173 = vst.msk [vmem:[#allocation2] sm:$0xff] %vm172, 0.0
      $region32: #{batch_norm_conv.2} parent=27 // pred_fallthru
        _
      %v174 = vld [vmem:[%s0] sm:$0xff]
      %v175 = vld [vmem:[%s163] sm:$0xff]
      %s176 = scalar_lea.vmem %s0, 8
      %v177 = vld [vmem:[%s176] sm:$0xff]
      %v178 = vld [vmem:[%s163] sm:$0xff]
      %v179 = vld [vmem:[%s163 + $0x8] sm:$0xff]
      %182 = vrot.lane.b32.xlu0 %v178, 127
      %v183 = vpop.permute.xlu0 %182
      %184 = vrot.lane.b32.xlu0 %v179, 127
      %v185 = vpop.permute.xlu0 %184
      %vm186 = vcmask 1039360
      %v187 = vsel %vm186, %v183, %v185
      %vm189 = vcmask 64512
      %v191 = vsel %vm189, %v177, 0
      %193 = vmatpush.msra.mxu0 0.0
      %194 = vmatpush.msra.mxu0 0.0
      %195 = vmatpush.msra.mxu0 0.0
      %196 = vmatpush.msra.mxu0 0.0
      %197 = vmatpush.msra.mxu0 0.0
      %198 = vmatpush.msra.mxu0 0.0
      %199 = vmatpush.msra.mxu0 0.0
      %200 = vmatpush.msra.mxu0 0.0
      %201 = vmatpush.msra.mxu0 0.0
      %202 = vmatpush.msra.mxu0 0.0
      %203 = vmatpush.msra.mxu0 0.0
      %204 = vmatpush.msra.mxu0 0.0
      %205 = vmatpush.msra.mxu0 0.0
      %206 = vmatpush.msra.mxu0 0.0
      %207 = vmatpush.msra.mxu0 0.0
      %208 = vmatpush.msra.mxu0 %v187
      %209 = vmatmul.f32.gmra.mxu0 %v191
      %v210 = vpop.f32.mrf.mxu0
      %v211 = vadd.f32 0.0, %v210
      %212 = vdwg.mxu0
      %v214 = vsel %vm189, %v174, 0
      %216 = vmatpush.msra.mxu0 0.0
      %217 = vmatpush.msra.mxu0 0.0
      %218 = vmatpush.msra.mxu0 0.0
      %219 = vmatpush.msra.mxu0 0.0
      %220 = vmatpush.msra.mxu0 0.0
      %221 = vmatpush.msra.mxu0 0.0
      %222 = vmatpush.msra.mxu0 0.0
      %223 = vmatpush.msra.mxu0 0.0
      %224 = vmatpush.msra.mxu0 0.0
      %225 = vmatpush.msra.mxu0 0.0
      %226 = vmatpush.msra.mxu0 0.0
      %227 = vmatpush.msra.mxu0 0.0
      %228 = vmatpush.msra.mxu0 0.0
      %229 = vmatpush.msra.mxu0 0.0
      %230 = vmatpush.msra.mxu0 0.0
      %231 = vmatpush.msra.mxu0 %v175
      %232 = vmatmul.f32.gmra.mxu0 %v214
      %v233 = vpop.f32.mrf.mxu0
      %v234 = vadd.f32 %v211, %v233
      %235 = vdwg.mxu0
      %s236 = scalar_lea.vmem %s0, 16
      %v237 = vld [vmem:[%s236] sm:$0xff]
      %238 = vrot.lane.b32.xlu0 %v178, 126
      %v239 = vpop.permute.xlu0 %238
      %240 = vrot.lane.b32.xlu0 %v179, 126
      %v241 = vpop.permute.xlu0 %240
      %vm242 = vcmask 1031168
      %v243 = vsel %vm242, %v239, %v241
      %v246 = vsel %vm189, %v237, 0
      %248 = vmatpush.msra.mxu0 0.0
      %249 = vmatpush.msra.mxu0 0.0
      %250 = vmatpush.msra.mxu0 0.0
      %251 = vmatpush.msra.mxu0 0.0
      %252 = vmatpush.msra.mxu0 0.0
      %253 = vmatpush.msra.mxu0 0.0
      %254 = vmatpush.msra.mxu0 0.0
      %255 = vmatpush.msra.mxu0 0.0
      %256 = vmatpush.msra.mxu0 0.0
      %257 = vmatpush.msra.mxu0 0.0
      %258 = vmatpush.msra.mxu0 0.0
      %259 = vmatpush.msra.mxu0 0.0
      %260 = vmatpush.msra.mxu0 0.0
      %261 = vmatpush.msra.mxu0 0.0
      %262 = vmatpush.msra.mxu0 0.0
      %263 = vmatpush.msra.mxu0 %v243
      %264 = vmatmul.f32.gmra.mxu0 %v246
      %v265 = vpop.f32.mrf.mxu0
      %v266 = vadd.f32 0.0, %v265
      %267 = vdwg.mxu0
      %v268 = vadd.f32 %v234, %v266
      %v269 = vmax.f32 %v268, 0.0
      %v270 = vlaneseq
      %v271 = vand.u32 %v270, 127
      %s272 = smul.u32 %s18, 128
      %s273 = ssub.s32 16, %s272
      %v274 = vstv %s273
      %vm275 = vcmp.lt.s32.totalorder %v271, %v274
      %v276 = vsel %vm275, %v269, 0.0
      %277 = vadd.xlane.f32.xlu0 %v276
      %v278 = vpop.xlane.xlu0 %277
      %v279 = vmul.f32 %v276, %v276
      %280 = vadd.xlane.f32.xlu0 %v279
      %v281 = vpop.xlane.xlu0 %280
      %v282 = vld [vmem:[#allocation2] sm:$0xff]
      %vm283 = vcmask 7168
      %v284 = vsel %vm283, %v278, %v281
      %v285 = vadd.f32 %v282, %v284
      %vm286 = vcmask 15360
      %287 = vst.msk [vmem:[#allocation2] sm:$0xff] %vm286, %v285
      // Predicated region
      $region33: #{batch_norm_conv.2} parent=27 // pred_check
        %p288 = pneg %p168
      $region34: #{batch_norm_conv.2} parent=27 // pred_check_branch
        %290 = sbr.rel (%p288) target = $region36
      $region35: #{batch_norm_conv.2} parent=27 // pred_region
        %v291 = vld [vmem:[#allocation2] sm:$0xff]
        %292 = vst.msk [vmem:[%s167] sm:$0xff] %vm286, %v291
      $region36: #{batch_norm_conv.2} parent=27 // pred_fallthru
        _
      %p293 = scmp.lt.s32.totalorder %s17, 1
      %s294 = scalar_select %p293, %s17, 1
      %s295 = smul.addr %s294, 8
      %s296 = scalar_lea.vmem %s2, %s295
      // Predicated region
      $region37: #{batch_norm_conv.2} parent=27 // pred_check
        %p297 = pneg %p92
      $region38: #{batch_norm_conv.2} parent=27 // pred_check_branch
        %299 = sbr.rel (%p297) target = $region40
      $region39: #{batch_norm_conv.2} parent=27 // pred_region
        _
      $region40: #{batch_norm_conv.2} parent=27 // pred_fallthru
        _
    $region28: #{batch_norm_conv.2} parent=5 // pred_fallthru
      _
    %p300 = scmp.le.s32.totalorder 2, %s8
    // Predicated region
    $region41: #{batch_norm_conv.2} parent=5 // pred_check
      %p301 = pneg %p300
    $region42: #{batch_norm_conv.2} parent=5 // pred_check_branch
      %303 = sbr.rel (%p301) target = $region44
    $region43: #{batch_norm_conv.2} parent=5 // pred_region
      %s304 = ssub.s32 %s8, 2
      // Predicated region
      $region45: #{batch_norm_conv.2} parent=43 // pred_check
        %p305 = pneg %p98
      $region46: #{batch_norm_conv.2} parent=43 // pred_check_branch
        %307 = sbr.rel (%p305) target = $region48
      $region47: #{batch_norm_conv.2} parent=43 // pred_region
        %p308 = scmp.lt.s32.totalorder %s19, 1
        %s309 = scalar_select %p308, %s19, 1
        %s310 = smul.addr %s309, 8
        %s311 = scalar_lea.vmem %s2, %s310
      $region48: #{batch_norm_conv.2} parent=43 // pred_fallthru
        _
    $region44: #{batch_norm_conv.2} parent=5 // pred_fallthru
      _
  $region6: #{batch_norm_conv.2} parent=0 // loop_footer
    %s12 = sadd.s32 1, %s8
  $region7: #{batch_norm_conv.2} parent=0 // loop_footer_branch
    %7 = sbr.rel target = $region3
  $region8: #{batch_norm_conv.2} parent=0 // loop_exit
    _

// kernel: batch_norm_conv.3
$region0: #{batch_norm_conv.3}
  #allocation0 [shape = 'u32[]', space=smem, size = 0x4, offset = 0x4, fixed_abs, tag = 'smem constant byte address 0x4 - core index']
  #allocation1 [shape = 'u32[72,128]{1,0:T(1,128)}', space=vmem, size = 0x9000, scoped, tag = 'internal scratch']
  %s0 = inlined_call_operand.vmem [shape: f32[3,8,8], index: 0, kind: input, shape index: {}]
  %s1 = inlined_call_operand.vmem [shape: f32[2,1,8,256], index: 1, kind: input, shape index: {}]
  %s2 = inlined_call_operand.vmem [shape: f32[8,1], index: 2, kind: input, shape index: {}]
  %s3 = inlined_call_operand.vmem [shape: f32[8,1], index: 3, kind: input, shape index: {}]
  %s4 = inlined_call_operand.hbm [shape: f32[2,8,128], index: 4, kind: output, shape index: {}]
  %s5 = sld [smem:[#allocation0]]
  $region49: #{batch_norm_conv.3} parent=0
    _
  %s7 = ssub.s32 1, %s5
  %s8 = scalar_select 0, %s7, %s5
  $region1: #{batch_norm_conv.3} parent=0
    #allocation2 [shape = 'u8[8192]{0}', space=vmem, size = 0x2000, scoped, tag = 'output window, operand 0']
    #allocation3 [shape = 's32[2]{0}', space=sflag, size = 0x8, scoped, tag = 'scoped memory for batch_norm_conv.3']
    %9 = vsyncpa [#allocation3], 0
    %s10 = scalar_lea.sflag [#allocation3], 1
    %11 = vsyncpa %s10, 0
    loop: start=0, step=1, limit=4
    $region2: #{batch_norm_conv.3} parent=1 // loop_pre_header
      _
    $region3: #{batch_norm_conv.3} parent=1 // loop_header
      %s13 = sphi 0, %s17
      %p14 = scmp.ge.s32.totalorder %s13, 4
      %s20 = sphi 0, %s32
      %s21 = sphi 0, %s28
      %s22 = sphi 0, %s20
      %s23 = sphi 0, %s21
      %s24 = sphi 0, %s22
      %s25 = sphi 0, %s23
      %s33 = sphi 0, %s33
      %s35 = sphi 0, %s33
      %s36 = sphi 0, %s35
      %s50 = sphi 0, %s36
      %s58 = sphi 0, %s60
      %s61 = sphi 0, %s58
      %s62 = sphi 0, %s61
      %s78 = sphi 0, %s62
      %s82 = sphi 0, %s82
      %s84 = sphi 0, %s82
      %s85 = sphi 0, %s84
      %s99 = sphi 0, %s85
      %s103 = sphi 0, %s103
      %s105 = sphi 0, %s103
      %s106 = sphi 0, %s105
      %s120 = sphi 0, %s106
      %s128 = sphi 0, %s130
      %s131 = sphi 0, %s128
      %s132 = sphi 0, %s131
      %s148 = sphi 0, %s132
    $region4: #{batch_norm_conv.3} parent=1 // loop_header_branch
      %16 = sbr.rel (%p14) target = $region8
    $region5: #{batch_norm_conv.3} parent=1 // loop_body
      %s18 = ssub.s32 %s13, 1
      %s19 = ssub.s32 %s13, 2
      %s26 = sadd.s32 1, %s21
      %p27 = scmp.ge.s32.totalorder %s26, 1
      %s28 = scalar_select %p27, 0, %s26
      %s29 = sadd.s32 1, %s20
      %s30 = scalar_select %p27, %s29, %s20
      %p31 = scmp.ge.s32.totalorder %s30, 2
      %s32 = scalar_select %p31, 0, %s30
      %s34 = sadd.s32 %s33, 1
      %p37 = scmp.eq.s32.totalorder %s13, 1
      %p38 = scmp.ne.s32.totalorder %s33, %s35
      %p39 = scmp.eq.s32.totalorder %s13, 0
      %p40 = por %p38, %p39
      %p41 = scmp.ne.s32.totalorder %s33, %s35
      %p42 = scmp.eq.s32.totalorder %s18, 1
      %p43 = por %p41, %p42
      %p44 = scmp.ne.s32.totalorder %s35, %s36
      %p45 = scmp.eq.s32.totalorder %s18, 0
      %p46 = por %p44, %p45
      %p47 = scmp.ne.s32.totalorder %s35, %s36
      %p48 = scmp.eq.s32.totalorder %s19, 1
      %p49 = por %p47, %p48
      %p51 = scmp.ne.s32.totalorder %s36, %s50
      %p52 = scmp.eq.s32.totalorder %s19, 0
      %p53 = por %p51, %p52
      %s54 = ssub.s32 %s20, %s32
      %s55 = ssub.s32 %s21, %s28
      %s56 = sor.u32 %s54, %s55
      %p57 = scmp.eq.s32.totalorder %s56, 0
      %s59 = sadd.s32 %s58, 1
      %s60 = scalar_select %p57, %s58, %s59
      %p63 = pneg %p57
      %p64 = scmp.eq.s32.totalorder %s13, 1
      %p65 = por %p63, %p64
      %p66 = scmp.ne.s32.totalorder %s58, %s61
      %p67 = scmp.eq.s32.totalorder %s13, 0
      %p68 = por %p66, %p67
      %p69 = scmp.ne.s32.totalorder %s58, %s61
      %p70 = scmp.eq.s32.totalorder %s18, 1
      %p71 = por %p69, %p70
      %p72 = scmp.ne.s32.totalorder %s61, %s62
      %p73 = scmp.eq.s32.totalorder %s18, 0
      %p74 = por %p72, %p73
      %p75 = scmp.ne.s32.totalorder %s61, %s62
      %p76 = scmp.eq.s32.totalorder %s19, 1
      %p77 = por %p75, %p76
      %p79 = scmp.ne.s32.totalorder %s62, %s78
      %p80 = scmp.eq.s32.totalorder %s19, 0
      %p81 = por %p79, %p80
      %s83 = sadd.s32 %s82, 1
      %p86 = scmp.eq.s32.totalorder %s13, 1
      %p87 = scmp.ne.s32.totalorder %s82, %s84
      %p88 = scmp.eq.s32.totalorder %s13, 0
      %p89 = por %p87, %p88
      %p90 = scmp.ne.s32.totalorder %s82, %s84
      %p91 = scmp.eq.s32.totalorder %s18, 1
      %p92 = por %p90, %p91
      %p93 = scmp.ne.s32.totalorder %s84, %s85
      %p94 = scmp.eq.s32.totalorder %s18, 0
      %p95 = por %p93, %p94
      %p96 = scmp.ne.s32.totalorder %s84, %s85
      %p97 = scmp.eq.s32.totalorder %s19, 1
      %p98 = por %p96, %p97
      %p100 = scmp.ne.s32.totalorder %s85, %s99
      %p101 = scmp.eq.s32.totalorder %s19, 0
      %p102 = por %p100, %p101
      %s104 = sadd.s32 %s103, 1
      %p107 = scmp.eq.s32.totalorder %s13, 1
      %p108 = scmp.ne.s32.totalorder %s103, %s105
      %p109 = scmp.eq.s32.totalorder %s13, 0
      %p110 = por %p108, %p109
      %p111 = scmp.ne.s32.totalorder %s103, %s105
      %p112 = scmp.eq.s32.totalorder %s18, 1
      %p113 = por %p111, %p112
      %p114 = scmp.ne.s32.totalorder %s105, %s106
      %p115 = scmp.eq.s32.totalorder %s18, 0
      %p116 = por %p114, %p115
      %p117 = scmp.ne.s32.totalorder %s105, %s106
      %p118 = scmp.eq.s32.totalorder %s19, 1
      %p119 = por %p117, %p118
      %p121 = scmp.ne.s32.totalorder %s106, %s120
      %p122 = scmp.eq.s32.totalorder %s19, 0
      %p123 = por %p121, %p122
      %s124 = ssub.s32 %s20, %s32
      %s125 = ssub.s32 %s21, %s28
      %s126 = sor.u32 %s124, %s125
      %p127 = scmp.eq.s32.totalorder %s126, 0
      %s129 = sadd.s32 %s128, 1
      %s130 = scalar_select %p127, %s128, %s129
      %p133 = pneg %p127
      %p134 = scmp.eq.s32.totalorder %s13, 1
      %p135 = por %p133, %p134
      %p136 = scmp.ne.s32.totalorder %s128, %s131
      %p137 = scmp.eq.s32.totalorder %s13, 0
      %p138 = por %p136, %p137
      %p139 = scmp.ne.s32.totalorder %s128, %s131
      %p140 = scmp.eq.s32.totalorder %s18, 1
      %p141 = por %p139, %p140
      %p142 = scmp.ne.s32.totalorder %s131, %s132
      %p143 = scmp.eq.s32.totalorder %s18, 0
      %p144 = por %p142, %p143
      %p145 = scmp.ne.s32.totalorder %s131, %s132
      %p146 = scmp.eq.s32.totalorder %s19, 1
      %p147 = por %p145, %p146
      %p149 = scmp.ne.s32.totalorder %s132, %s148
      %p150 = scmp.eq.s32.totalorder %s19, 0
      %p151 = por %p149, %p150
      %p152 = scmp.le.s32.totalorder 1, %s13
      %p153 = scmp.lt.s32.totalorder %s13, 3
      %p154 = pnand %p152, %p153
      %p155 = pneg %p154
      // Predicated region
      $region9: #{batch_norm_conv.3} parent=5 // pred_check
        _
      $region10: #{batch_norm_conv.3} parent=5 // pred_check_branch
        %157 = sbr.rel (%p154) target = $region12
      $region11: #{batch_norm_conv.3} parent=5 // pred_region
        %s158 = ssub.s32 %s13, 1
        // Predicated region
        $region13: #{batch_norm_conv.3} parent=11 // pred_check
          %p159 = pneg %p46
        $region14: #{batch_norm_conv.3} parent=11 // pred_check_branch
          %161 = sbr.rel (%p159) target = $region16
        $region15: #{batch_norm_conv.3} parent=11 // pred_region
          _
        $region16: #{batch_norm_conv.3} parent=11 // pred_fallthru
          _
        // Predicated region
        $region17: #{batch_norm_conv.3} parent=11 // pred_check
          %p162 = pneg %p95
        $region18: #{batch_norm_conv.3} parent=11 // pred_check_branch
          %164 = sbr.rel (%p162) target = $region20
        $region19: #{batch_norm_conv.3} parent=11 // pred_region
          _
        $region20: #{batch_norm_conv.3} parent=11 // pred_fallthru
          _
        // Predicated region
        $region21: #{batch_norm_conv.3} parent=11 // pred_check
          %p165 = pneg %p116
        $region22: #{batch_norm_conv.3} parent=11 // pred_check_branch
          %167 = sbr.rel (%p165) target = $region24
        $region23: #{batch_norm_conv.3} parent=11 // pred_region
          _
        $region24: #{batch_norm_conv.3} parent=11 // pred_fallthru
          _
      $region12: #{batch_norm_conv.3} parent=5 // pred_fallthru
        _
      %p168 = scmp.lt.s32.totalorder %s13, 2
      // Predicated region
      $region25: #{batch_norm_conv.3} parent=5 // pred_check
        %p169 = pneg %p168
      $region26: #{batch_norm_conv.3} parent=5 // pred_check_branch
        %171 = sbr.rel (%p169) target = $region28
      $region27: #{batch_norm_conv.3} parent=5 // pred_region
        // Predicated region
        $region29: #{batch_norm_conv.3} parent=27 // pred_check
          %p172 = pneg %p68
        $region30: #{batch_norm_conv.3} parent=27 // pred_check_branch
          %174 = sbr.rel (%p172) target = $region32
        $region31: #{batch_norm_conv.3} parent=27 // pred_region
          %p175 = scmp.lt.s32.totalorder %s20, 1
          %s176 = scalar_select %p175, %s20, 1
          %p177 = scmp.lt.s32.totalorder %s21, 0
          %s178 = scalar_select %p177, %s21, 0
          %s179 = smul.addr %s178, 2
          %s180 = smul.addr %s176, 2
          %s181 = sadd.s32 %s179, %s180
          %s182 = smul.addr %s181, 8
          %s183 = scalar_lea.vmem %s1, %s182
        $region32: #{batch_norm_conv.3} parent=27 // pred_fallthru
          _
      $region28: #{batch_norm_conv.3} parent=5 // pred_fallthru
        _
      %p184 = scmp.le.s32.totalorder 1, %s13
      %p185 = scmp.lt.s32.totalorder %s13, 3
      %p186 = pnand %p184, %p185
      %p187 = pneg %p186
      // Predicated region
      $region33: #{batch_norm_conv.3} parent=5 // pred_check
        _
      $region34: #{batch_norm_conv.3} parent=5 // pred_check_branch
        %189 = sbr.rel (%p186) target = $region36
      $region35: #{batch_norm_conv.3} parent=5 // pred_region
        %s190 = ssub.s32 %s13, 1
        %p191 = pneg %p46
        %p192 = pneg %p43
        %p193 = scmp.lt.s32.totalorder %s22, 1
        %s194 = scalar_select %p193, %s22, 1
        %p195 = scmp.lt.s32.totalorder %s23, 0
        %s196 = scalar_select %p195, %s23, 0
        %s197 = smul.addr %s196, 2
        %s198 = smul.addr %s194, 2
        %s199 = sadd.s32 %s197, %s198
        %s200 = smul.addr %s199, 8
        %s201 = scalar_lea.vmem %s1, %s200
        %p202 = pneg %p74
        %p203 = pneg %p71
        %p204 = pneg %p95
        %p205 = pneg %p92
        %p206 = pneg %p116
        %p207 = pneg %p113
        %p208 = pneg %p144
        %p209 = pneg %p141
        %s210 = sand.u32 %s131, 1
        %s211 = scalar_lea.sflag [#allocation3], %s210
        %s212 = sand.u32 %s131, 1
        %s213 = smul.addr %s212, 8
        %s214 = scalar_lea.vmem [#allocation2], %s213
        %p215 = scmp.lt.s32.totalorder %s22, 1
        %s216 = scalar_select %p215, %s22, 1
        %p217 = scmp.lt.s32.totalorder %s23, 0
        %s218 = scalar_select %p217, %s23, 0
        %s219 = smul.addr %s218, 2
        %s220 = smul.addr %s216, 2
        %s221 = sadd.s32 %s219, %s220
        %s222 = smul.addr %s221, 8
        %s223 = scalar_lea.vmem %s1, %s222
        %v224 = vld [vmem:[%s0] sm:$0xff]
        %v225 = vld [vmem:[%s223] sm:$0xff]
        %s226 = scalar_lea.vmem %s0, 8
        %v227 = vld [vmem:[%s226] sm:$0xff]
        %v228 = vld [vmem:[%s223] sm:$0xff]
        %v229 = vld [vmem:[%s223 + $0x8] sm:$0xff]
        %232 = vrot.lane.b32.xlu0 %v228, 127
        %v233 = vpop.permute.xlu0 %232
        %234 = vrot.lane.b32.xlu0 %v229, 127
        %v235 = vpop.permute.xlu0 %234
        %vm236 = vcmask 1039360
        %v237 = vsel %vm236, %v233, %v235
        %vm239 = vcmask 64512
        %v241 = vsel %vm239, %v227, 0
        %243 = vmatpush.msra.mxu0 0.0
        %244 = vmatpush.msra.mxu0 0.0
        %245 = vmatpush.msra.mxu0 0.0
        %246 = vmatpush.msra.mxu0 0.0
        %247 = vmatpush.msra.mxu0 0.0
        %248 = vmatpush.msra.mxu0 0.0
        %249 = vmatpush.msra.mxu0 0.0
        %250 = vmatpush.msra.mxu0 0.0
        %251 = vmatpush.msra.mxu0 0.0
        %252 = vmatpush.msra.mxu0 0.0
        %253 = vmatpush.msra.mxu0 0.0
        %254 = vmatpush.msra.mxu0 0.0
        %255 = vmatpush.msra.mxu0 0.0
        %256 = vmatpush.msra.mxu0 0.0
        %257 = vmatpush.msra.mxu0 0.0
        %258 = vmatpush.msra.mxu0 %v237
        %259 = vmatmul.f32.gmra.mxu0 %v241
        %v260 = vpop.f32.mrf.mxu0
        %v261 = vadd.f32 0.0, %v260
        %262 = vdwg.mxu0
        %v264 = vsel %vm239, %v224, 0
        %266 = vmatpush.msra.mxu0 0.0
        %267 = vmatpush.msra.mxu0 0.0
        %268 = vmatpush.msra.mxu0 0.0
        %269 = vmatpush.msra.mxu0 0.0
        %270 = vmatpush.msra.mxu0 0.0
        %271 = vmatpush.msra.mxu0 0.0
        %272 = vmatpush.msra.mxu0 0.0
        %273 = vmatpush.msra.mxu0 0.0
        %274 = vmatpush.msra.mxu0 0.0
        %275 = vmatpush.msra.mxu0 0.0
        %276 = vmatpush.msra.mxu0 0.0
        %277 = vmatpush.msra.mxu0 0.0
        %278 = vmatpush.msra.mxu0 0.0
        %279 = vmatpush.msra.mxu0 0.0
        %280 = vmatpush.msra.mxu0 0.0
        %281 = vmatpush.msra.mxu0 %v225
        %282 = vmatmul.f32.gmra.mxu0 %v264
        %v283 = vpop.f32.mrf.mxu0
        %v284 = vadd.f32 %v261, %v283
        %285 = vdwg.mxu0
        %s286 = scalar_lea.vmem %s0, 16
        %v287 = vld [vmem:[%s286] sm:$0xff]
        %288 = vrot.lane.b32.xlu0 %v228, 126
        %v289 = vpop.permute.xlu0 %288
        %290 = vrot.lane.b32.xlu0 %v229, 126
        %v291 = vpop.permute.xlu0 %290
        %vm292 = vcmask 1031168
        %v293 = vsel %vm292, %v289, %v291
        %v296 = vsel %vm239, %v287, 0
        %298 = vmatpush.msra.mxu0 0.0
        %299 = vmatpush.msra.mxu0 0.0
        %300 = vmatpush.msra.mxu0 0.0
        %301 = vmatpush.msra.mxu0 0.0
        %302 = vmatpush.msra.mxu0 0.0
        %303 = vmatpush.msra.mxu0 0.0
        %304 = vmatpush.msra.mxu0 0.0
        %305 = vmatpush.msra.mxu0 0.0
        %306 = vmatpush.msra.mxu0 0.0
        %307 = vmatpush.msra.mxu0 0.0
        %308 = vmatpush.msra.mxu0 0.0
        %309 = vmatpush.msra.mxu0 0.0
        %310 = vmatpush.msra.mxu0 0.0
        %311 = vmatpush.msra.mxu0 0.0
        %312 = vmatpush.msra.mxu0 0.0
        %313 = vmatpush.msra.mxu0 %v293
        %314 = vmatmul.f32.gmra.mxu0 %v296
        %v315 = vpop.f32.mrf.mxu0
        %v316 = vadd.f32 0.0, %v315
        %317 = vdwg.mxu0
        %v318 = vadd.f32 %v284, %v316
        %v319 = vmax.f32 %v318, 0.0
        %v320 = vld [vmem:[%s2] sm:$0xff]
        %322 = vset.pattern.permute.xlu0 0
        %323 = vperm.xlu0 %322, %v320
        %v324 = vpop.permute.xlu0 %323
        %v326 = vmul.f32 %v319, %v324
        %v327 = vld [vmem:[%s3] sm:$0xff]
        %329 = vset.pattern.permute.xlu0 0
        %330 = vperm.xlu0 %329, %v327
        %v331 = vpop.permute.xlu0 %330
        %v333 = vadd.f32 %v326, %v331
        %334 = vst [vmem:[%s214] sm:$0xff] %v333
        %s335 = sand.u32 %s131, 1
        %s336 = scalar_lea.sflag [#allocation3], %s335
        %s337 = sand.u32 %s131, 1
        %s338 = smul.addr %s337, 8
        %s339 = scalar_lea.vmem [#allocation2], %s338
        // Predicated region
        $region37: #{batch_norm_conv.3} parent=35 // pred_check
          %p340 = pneg %p141
        $region38: #{batch_norm_conv.3} parent=35 // pred_check_branch
          %342 = sbr.rel (%p340) target = $region40
        $region39: #{batch_norm_conv.3} parent=35 // pred_region
          %344 = vsyncadd %s336, 0
          %s345 = sadd.s32 %s23, %s22
          %s346 = smul.addr %s345, 8
          %s347 = scalar_lea.hbm %s4, %s346
          %s349 = sshll.u32 %s339, 4
          %s350 = int_to_ptr.vmem [resolvable:$true] %s349
          %s351 = sshll.u32 %s347, 4
          %s352 = int_to_ptr.hbm [resolvable:$true] %s351
          %354 = dma.vmem_to_hbm [thread:$0]  %s350, 128, %s352, %s336
        $region40: #{batch_norm_conv.3} parent=35 // pred_fallthru
          _
      $region36: #{batch_norm_conv.3} parent=5 // pred_fallthru
        _
      %p355 = scmp.le.s32.totalorder 2, %s13
      // Predicated region
      $region41: #{batch_norm_conv.3} parent=5 // pred_check
        %p356 = pneg %p355
      $region42: #{batch_norm_conv.3} parent=5 // pred_check_branch
        %358 = sbr.rel (%p356) target = $region44
      $region43: #{batch_norm_conv.3} parent=5 // pred_region
        %s359 = ssub.s32 %s13, 2
        // Predicated region
        $region45: #{batch_norm_conv.3} parent=43 // pred_check
          %p360 = pneg %p147
        $region46: #{batch_norm_conv.3} parent=43 // pred_check_branch
          %362 = sbr.rel (%p360) target = $region48
        $region47: #{batch_norm_conv.3} parent=43 // pred_region
          %s363 = sand.u32 %s132, 1
          %s364 = scalar_lea.sflag [#allocation3], %s363
          %s365 = sand.u32 %s132, 1
          %s366 = smul.addr %s365, 8
          %s367 = scalar_lea.vmem [#allocation2], %s366
          %369 = dma.done %s364, 128
        $region48: #{batch_norm_conv.3} parent=43 // pred_fallthru
          _
      $region44: #{batch_norm_conv.3} parent=5 // pred_fallthru
        _
    $region6: #{batch_norm_conv.3} parent=1 // loop_footer
      %s17 = sadd.s32 1, %s13
    $region7: #{batch_norm_conv.3} parent=1 // loop_footer_branch
      %12 = sbr.rel target = $region3
    $region8: #{batch_norm_conv.3} parent=1 // loop_exit
      _
    %370 = vsyncpa [#allocation3], 1
    %s371 = scalar_lea.sflag [#allocation3], 1
    %372 = vsyncpa %s371, 1

</llo_original>
